<compile_context>
chip_gen: v5e
topology: v5e:2x2
jax: 0.10.0
libtpu: 0.0.40
codegen_flags: <defaults>
</compile_context>

<pallas_src>
import numpy as np
import jax
import jax.numpy as jnp
from jax.experimental import pallas as pl
from jax.experimental.pallas import tpu as pltpu

_EPS = 1e-5


# ------------------------------ Pallas kernel -------------------------------
def _fused_stem_kernel(*refs):
    """Whole conv stem for one image.

    refs = (x, [R_l, A_l, shift_l] * n_conv, W_head_blk, bias_row, out)
      x          : (1, Hin, Win*Cin)      input image, row layout, f32
      R_l        : (k, Ho, Hin)           0/1 row selection per vertical tap
      A_l        : (k, Win*Cin, Wo*Cout)  BN-folded weights per vertical tap
      shift_l    : (1, Wo*Cout)           BN shift, tiled over Wo
      W_head_blk : (Wo*C, Wo*d_model)     block-diagonal 1x1-conv weight
      bias_row   : (1, Wo*d_model)        head bias, tiled over Wo
      out        : (1, Ho, Wo*d_model)    bf16, row layout (lane dense)
    """
    x_ref, o_ref = refs[0], refs[-1]
    w_head_ref, bias_ref = refs[-3], refs[-2]
    n_conv = (len(refs) - 4) // 3

    a = x_ref[0]                                          # (Hin, Win*Cin) f32
    for layer in range(n_conv):
        r_ref, a_ref, s_ref = refs[1 + 3 * layer: 4 + 3 * layer]
        k = r_ref.shape[0]
        acc = None
        for dy in range(k):                               # static, unrolled
            rows = jnp.dot(r_ref[dy], a, preferred_element_type=jnp.float32)
            term = jnp.dot(rows, a_ref[dy], preferred_element_type=jnp.float32)
            acc = term if acc is None else acc + term
        a = jnp.maximum(acc + s_ref[...], 0.0)            # BN shift + ReLU

    out = jnp.dot(a, w_head_ref[...], preferred_element_type=jnp.float32)
    o_ref[0] = (out + bias_ref[...]).astype(o_ref.dtype)


# ------------------------ host-side operator building -----------------------
def _conv_bn_row_operators(w_oihw, gamma, beta, rmean, rvar, hin, win):
    """Conv2d(stride=2, pad=1, bias=False) + BN(eval) as row-layout matrices."""
    cout, cin, k, _ = w_oihw.shape
    ho = (hin + 2 - k) // 2 + 1
    wo = (win + 2 - k) // 2 + 1

    inv_std = 1.0 / jnp.sqrt(rvar + _EPS)
    scale = gamma * inv_std
    shift = beta - rmean * scale
    w_scaled = w_oihw * scale[:, None, None, None]        # fold BN scale

    # R[dy, i, r] = [r == 2*i + dy - 1]   (0/1, structural -> numpy)
    dy = np.arange(k)[:, None, None]
    i = np.arange(ho)[None, :, None]
    r = np.arange(hin)[None, None, :]
    R = (r == 2 * i + dy - 1).astype(np.float32)          # (k, ho, hin)

    # P[dx, wc, j] = [wc == 2*j + dx - 1]
    dx = np.arange(k)[:, None, None]
    wc = np.arange(win)[None, :, None]
    j = np.arange(wo)[None, None, :]
    P = (wc == 2 * j + dx - 1).astype(np.float32)          # (k, win, wo)

    # A[dy, wc*cin + c, j*cout + o] = sum_dx P[dx, wc, j] * w_scaled[o, c, dy, dx]
    A = jnp.einsum("xwj,ocyx->ywcjo", jnp.asarray(P), w_scaled)
    A = A.reshape(k, win * cin, wo * cout).astype(jnp.float32)

    shift_row = jnp.tile(shift, (wo,)).reshape(1, wo * cout).astype(jnp.float32)
    return jnp.asarray(R), A, shift_row, ho, wo, cout


def _head_row_operators(w_head, b_head, wo):
    """1x1 conv head as a block-diagonal matrix acting on row-layout input."""
    d_model, c = w_head.shape[0], w_head.shape[1]
    w_mat = w_head.reshape(d_model, c).T.astype(jnp.float32)         # (c, d_model)
    w_blk = jnp.kron(jnp.eye(wo, dtype=jnp.float32), w_mat)          # (wo*c, wo*d_model)
    bias_row = jnp.tile(b_head, (wo,)).reshape(1, wo * d_model).astype(jnp.float32)
    return w_blk, bias_row


def _resident_spec(arr):
    """Full-array block that stays VMEM-resident across all grid steps."""
    if arr.ndim == 3:
        return pl.BlockSpec(arr.shape, lambda i: (0, 0, 0))
    return pl.BlockSpec(arr.shape, lambda i: (0, 0))


# --------------------------------- forward ----------------------------------
def img_conv_stem_backbone(params, x_nchw):
    """Matches ImgConvStemBackbone.forward: returns (B, Ho*Wo, d_model)."""
    b, c0, h, w = x_nchw.shape
    # NCHW -> row layout (B, H, W*C); kept f32 (first-layer accuracy; tiny read).
    x_row = jnp.transpose(x_nchw, (0, 2, 3, 1)).reshape(b, h, w * c0)
    x_row = x_row.astype(jnp.float32)

    operands = [x_row]
    in_specs = [pl.BlockSpec((1, h, w * c0), lambda i: (i, 0, 0))]

    hin, win, cin = h, w, c0
    for (wconv, gamma, beta, rmean, rvar) in params["conv_bn"]:
        R, A, shift_row, hin, win, cin = _conv_bn_row_operators(
            wconv, gamma, beta, rmean, rvar, hin, win)
        for arr in (R, A, shift_row):
            operands.append(arr)
            in_specs.append(_resident_spec(arr))

    w_head, b_head = params["head"]
    d_model = w_head.shape[0]
    w_blk, bias_row = _head_row_operators(w_head, b_head, win)
    for arr in (w_blk, bias_row):
        operands.append(arr)
        in_specs.append(_resident_spec(arr))

    out_row = pl.pallas_call(
        _fused_stem_kernel,
        out_shape=jax.ShapeDtypeStruct((b, hin, win * d_model), jnp.bfloat16),
        grid=(b,),
        in_specs=in_specs,
        out_specs=pl.BlockSpec((1, hin, win * d_model), lambda i: (i, 0, 0)),
        compiler_params=pltpu.CompilerParams(
            dimension_semantics=("parallel",),
            vmem_limit_bytes=32 * 1024 * 1024),
    )(*operands)

    # (B, Ho, Wo*d_model) -> (B, Ho*Wo, d_model): free layout plumbing.
    return out_row.reshape(b, hin * win, d_model)


# ------------------------------ parameter init ------------------------------
def init_params(key, d_model, downsample_factor, output_channels, kernel_size):
    assert downsample_factor % 2 == 0
    assert output_channels % (downsample_factor // 2) == 0
    in_ch = output_channels // (downsample_factor // 2)
    chans = [(3, in_ch)]
    while in_ch != output_channels:
        chans.append((in_ch, in_ch * 2))
        in_ch *= 2
    params = {"conv_bn": [], "head": None}
    for (ci, co) in chans:
        key, k1, k2, k3 = jax.random.split(key, 4)
        wgt = 0.1 * jax.random.normal(k1, (co, ci, kernel_size, kernel_size), jnp.float32)
        gamma = 1.0 + 0.05 * jax.random.normal(k2, (co,), jnp.float32)
        beta = 0.05 * jax.random.normal(k3, (co,), jnp.float32)
        rmean = jnp.zeros((co,), jnp.float32)   # BatchNorm running stats (fresh init)
        rvar = jnp.ones((co,), jnp.float32)
        params["conv_bn"].append((wgt, gamma, beta, rmean, rvar))
    key, k1, k2 = jax.random.split(key, 3)
    w_head = 0.1 * jax.random.normal(k1, (d_model, output_channels, 1, 1), jnp.float32)
    b_head = 0.05 * jax.random.normal(k2, (d_model,), jnp.float32)
    params["head"] = (w_head, b_head)
    return params


# --------------------------- pure-JAX reference ------------------------------
def reference(params, x_nchw):
    x = jnp.transpose(x_nchw, (0, 2, 3, 1))
    for (wgt, g, bta, rm, rv) in params["conv_bn"]:
        w_hwio = jnp.transpose(wgt, (2, 3, 1, 0))
        y = jax.lax.conv_general_dilated(
            x, w_hwio, window_strides=(2, 2), padding=((1, 1), (1, 1)),
            dimension_numbers=("NHWC", "HWIO", "NHWC"))
        y = (y - rm) / jnp.sqrt(rv + _EPS) * g + bta
        x = jnp.maximum(y, 0.0)
    w_head, b_head = params["head"]
    w_hwio = jnp.transpose(w_head, (2, 3, 1, 0))
    y = jax.lax.conv_general_dilated(
        x, w_hwio, (1, 1), "VALID",
        dimension_numbers=("NHWC", "HWIO", "NHWC")) + b_head
    bsz, hh, ww, dd = y.shape
    return y.reshape(bsz, hh * ww, dd)


if __name__ == "__main__":
    # Module config: downsample_factor=4 -> input_channels = 8 // 2 = 4
    # layers: Conv(3->4,k3 s2 p1)+BN+ReLU, Conv(4->8,k3 s2 p1)+BN+ReLU, Conv1x1(8->32)
    d_model = 32
    downsample_factor = 4
    output_channels = 8
    kernel_size = 3

    key = jax.random.PRNGKey(0)
    key, kx, kp = jax.random.split(key, 3)
    x = jax.random.normal(kx, (2, 3, 16, 16), jnp.float32)   # NCHW, like PyTorch
    params = init_params(kp, d_model, downsample_factor, output_channels, kernel_size)

    out = jax.block_until_ready(img_conv_stem_backbone(params, x))
    assert out.shape == (2, (16 // downsample_factor) ** 2, d_model), out.shape

    ref = jax.block_until_ready(reference(params, x))
    out_f32 = out.astype(jnp.float32)
    max_err = float(jnp.max(jnp.abs(out_f32 - ref)))
    # f32 compute with f32 accumulation inside the kernel; only the final store
    # is bf16, so tolerance just needs to cover bf16 output rounding.
    assert jnp.allclose(out_f32, ref, atol=2e-2, rtol=2e-2), max_err

    print("KERNEL_OK")
</pallas_src>

<mosaic_0001>
module attributes {stable_mosaic.version = 11 : i64} {
  func.func @_fused_stem_kernel(%arg0: i32, %arg1: memref<1x16x48xf32, #tpu.memory_space<vmem>>, %arg2: memref<3x8x16xf32, #tpu.memory_space<vmem>>, %arg3: memref<3x48x32xf32, #tpu.memory_space<vmem>>, %arg4: memref<1x32xf32, #tpu.memory_space<vmem>>, %arg5: memref<3x4x8xf32, #tpu.memory_space<vmem>>, %arg6: memref<3x32x32xf32, #tpu.memory_space<vmem>>, %arg7: memref<1x32xf32, #tpu.memory_space<vmem>>, %arg8: memref<32x128xf32, #tpu.memory_space<vmem>>, %arg9: memref<1x128xf32, #tpu.memory_space<vmem>>, %arg10: memref<1x4x128xbf16, #tpu.memory_space<vmem>>) attributes {dimension_semantics = [#tpu.dimension_semantics<parallel>], iteration_bounds = array<i64: 2>, scalar_prefetch = 0 : i64, scratch_operands = 0 : i64, tpu.core_type = #tpu.core_type<tc>, window_params = [{transform_indices = @transform_0, window_bounds = array<i64: 1, 16, 48>}, {pipeline_mode = #tpu.pipeline_mode<synchronous>, transform_indices = @transform_1, window_bounds = array<i64: 3, 8, 16>}, {pipeline_mode = #tpu.pipeline_mode<synchronous>, transform_indices = @transform_2, window_bounds = array<i64: 3, 48, 32>}, {pipeline_mode = #tpu.pipeline_mode<synchronous>, transform_indices = @transform_3, window_bounds = array<i64: 1, 32>}, {pipeline_mode = #tpu.pipeline_mode<synchronous>, transform_indices = @transform_4, window_bounds = array<i64: 3, 4, 8>}, {pipeline_mode = #tpu.pipeline_mode<synchronous>, transform_indices = @transform_5, window_bounds = array<i64: 3, 32, 32>}, {pipeline_mode = #tpu.pipeline_mode<synchronous>, transform_indices = @transform_6, window_bounds = array<i64: 1, 32>}, {pipeline_mode = #tpu.pipeline_mode<synchronous>, transform_indices = @transform_7, window_bounds = array<i64: 32, 128>}, {pipeline_mode = #tpu.pipeline_mode<synchronous>, transform_indices = @transform_8, window_bounds = array<i64: 1, 128>}, {transform_indices = @transform_9, window_bounds = array<i64: 1, 4, 128>}]} {
    %c0 = arith.constant 0 : index
    %c0_0 = arith.constant 0 : index
    %c0_1 = arith.constant 0 : index
    %0 = vector.load %arg1[%c0, %c0_0, %c0_1] : memref<1x16x48xf32, #tpu.memory_space<vmem>>, vector<1x16x48xf32>
    %1 = vector.shape_cast %0 : vector<1x16x48xf32> to vector<16x48xf32>
    %c0_2 = arith.constant 0 : index
    %c0_3 = arith.constant 0 : index
    %c0_4 = arith.constant 0 : index
    %2 = vector.load %arg2[%c0_2, %c0_3, %c0_4] : memref<3x8x16xf32, #tpu.memory_space<vmem>>, vector<1x8x16xf32>
    %3 = vector.shape_cast %2 : vector<1x8x16xf32> to vector<8x16xf32>
    %cst = arith.constant dense<0.000000e+00> : vector<8x48xf32>
    %4 = tpu.matmul %3, %1, %cst {dimension_numbers = #tpu.dot_dimension_numbers<[1], [0], [0], [1], [0, 0, 1, 1], [], []>} : vector<8x16xf32>, vector<16x48xf32>, vector<8x48xf32> -> vector<8x48xf32>
    %c0_5 = arith.constant 0 : index
    %c0_6 = arith.constant 0 : index
    %c0_7 = arith.constant 0 : index
    %5 = vector.load %arg3[%c0_5, %c0_6, %c0_7] : memref<3x48x32xf32, #tpu.memory_space<vmem>>, vector<1x48x32xf32>
    %6 = vector.shape_cast %5 : vector<1x48x32xf32> to vector<48x32xf32>
    %cst_8 = arith.constant dense<0.000000e+00> : vector<8x32xf32>
    %7 = tpu.matmul %4, %6, %cst_8 {dimension_numbers = #tpu.dot_dimension_numbers<[1], [0], [0], [1], [0, 0, 1, 1], [], []>} : vector<8x48xf32>, vector<48x32xf32>, vector<8x32xf32> -> vector<8x32xf32>
    %c1 = arith.constant 1 : index
    %c0_9 = arith.constant 0 : index
    %c0_10 = arith.constant 0 : index
    %8 = vector.load %arg2[%c1, %c0_9, %c0_10] : memref<3x8x16xf32, #tpu.memory_space<vmem>>, vector<1x8x16xf32>
    %9 = vector.shape_cast %8 : vector<1x8x16xf32> to vector<8x16xf32>
    %cst_11 = arith.constant dense<0.000000e+00> : vector<8x48xf32>
    %10 = tpu.matmul %9, %1, %cst_11 {dimension_numbers = #tpu.dot_dimension_numbers<[1], [0], [0], [1], [0, 0, 1, 1], [], []>} : vector<8x16xf32>, vector<16x48xf32>, vector<8x48xf32> -> vector<8x48xf32>
    %c1_12 = arith.constant 1 : index
    %c0_13 = arith.constant 0 : index
    %c0_14 = arith.constant 0 : index
    %11 = vector.load %arg3[%c1_12, %c0_13, %c0_14] : memref<3x48x32xf32, #tpu.memory_space<vmem>>, vector<1x48x32xf32>
    %12 = vector.shape_cast %11 : vector<1x48x32xf32> to vector<48x32xf32>
    %cst_15 = arith.constant dense<0.000000e+00> : vector<8x32xf32>
    %13 = tpu.matmul %10, %12, %cst_15 {dimension_numbers = #tpu.dot_dimension_numbers<[1], [0], [0], [1], [0, 0, 1, 1], [], []>} : vector<8x48xf32>, vector<48x32xf32>, vector<8x32xf32> -> vector<8x32xf32>
    %14 = arith.addf %7, %13 : vector<8x32xf32>
    %c2 = arith.constant 2 : index
    %c0_16 = arith.constant 0 : index
    %c0_17 = arith.constant 0 : index
    %15 = vector.load %arg2[%c2, %c0_16, %c0_17] : memref<3x8x16xf32, #tpu.memory_space<vmem>>, vector<1x8x16xf32>
    %16 = vector.shape_cast %15 : vector<1x8x16xf32> to vector<8x16xf32>
    %cst_18 = arith.constant dense<0.000000e+00> : vector<8x48xf32>
    %17 = tpu.matmul %16, %1, %cst_18 {dimension_numbers = #tpu.dot_dimension_numbers<[1], [0], [0], [1], [0, 0, 1, 1], [], []>} : vector<8x16xf32>, vector<16x48xf32>, vector<8x48xf32> -> vector<8x48xf32>
    %c2_19 = arith.constant 2 : index
    %c0_20 = arith.constant 0 : index
    %c0_21 = arith.constant 0 : index
    %18 = vector.load %arg3[%c2_19, %c0_20, %c0_21] : memref<3x48x32xf32, #tpu.memory_space<vmem>>, vector<1x48x32xf32>
    %19 = vector.shape_cast %18 : vector<1x48x32xf32> to vector<48x32xf32>
    %cst_22 = arith.constant dense<0.000000e+00> : vector<8x32xf32>
    %20 = tpu.matmul %17, %19, %cst_22 {dimension_numbers = #tpu.dot_dimension_numbers<[1], [0], [0], [1], [0, 0, 1, 1], [], []>} : vector<8x48xf32>, vector<48x32xf32>, vector<8x32xf32> -> vector<8x32xf32>
    %21 = arith.addf %14, %20 : vector<8x32xf32>
    %c0_23 = arith.constant 0 : index
    %c0_24 = arith.constant 0 : index
    %22 = vector.load %arg4[%c0_23, %c0_24] : memref<1x32xf32, #tpu.memory_space<vmem>>, vector<1x32xf32>
    %23 = vector.broadcast %22 : vector<1x32xf32> to vector<8x32xf32>
    %24 = arith.addf %21, %23 : vector<8x32xf32>
    %cst_25 = arith.constant 0.000000e+00 : f32
    %25 = vector.broadcast %cst_25 : f32 to vector<8x32xf32>
    %26 = arith.maximumf %24, %25 : vector<8x32xf32>
    %c0_26 = arith.constant 0 : index
    %c0_27 = arith.constant 0 : index
    %c0_28 = arith.constant 0 : index
    %27 = vector.load %arg5[%c0_26, %c0_27, %c0_28] : memref<3x4x8xf32, #tpu.memory_space<vmem>>, vector<1x4x8xf32>
    %28 = vector.shape_cast %27 : vector<1x4x8xf32> to vector<4x8xf32>
    %cst_29 = arith.constant dense<0.000000e+00> : vector<4x32xf32>
    %29 = tpu.matmul %28, %26, %cst_29 {dimension_numbers = #tpu.dot_dimension_numbers<[1], [0], [0], [1], [0, 0, 1, 1], [], []>} : vector<4x8xf32>, vector<8x32xf32>, vector<4x32xf32> -> vector<4x32xf32>
    %c0_30 = arith.constant 0 : index
    %c0_31 = arith.constant 0 : index
    %c0_32 = arith.constant 0 : index
    %30 = vector.load %arg6[%c0_30, %c0_31, %c0_32] : memref<3x32x32xf32, #tpu.memory_space<vmem>>, vector<1x32x32xf32>
    %31 = vector.shape_cast %30 : vector<1x32x32xf32> to vector<32x32xf32>
    %cst_33 = arith.constant dense<0.000000e+00> : vector<4x32xf32>
    %32 = tpu.matmul %29, %31, %cst_33 {dimension_numbers = #tpu.dot_dimension_numbers<[1], [0], [0], [1], [0, 0, 1, 1], [], []>} : vector<4x32xf32>, vector<32x32xf32>, vector<4x32xf32> -> vector<4x32xf32>
    %c1_34 = arith.constant 1 : index
    %c0_35 = arith.constant 0 : index
    %c0_36 = arith.constant 0 : index
    %33 = vector.load %arg5[%c1_34, %c0_35, %c0_36] : memref<3x4x8xf32, #tpu.memory_space<vmem>>, vector<1x4x8xf32>
    %34 = vector.shape_cast %33 : vector<1x4x8xf32> to vector<4x8xf32>
    %cst_37 = arith.constant dense<0.000000e+00> : vector<4x32xf32>
    %35 = tpu.matmul %34, %26, %cst_37 {dimension_numbers = #tpu.dot_dimension_numbers<[1], [0], [0], [1], [0, 0, 1, 1], [], []>} : vector<4x8xf32>, vector<8x32xf32>, vector<4x32xf32> -> vector<4x32xf32>
    %c1_38 = arith.constant 1 : index
    %c0_39 = arith.constant 0 : index
    %c0_40 = arith.constant 0 : index
    %36 = vector.load %arg6[%c1_38, %c0_39, %c0_40] : memref<3x32x32xf32, #tpu.memory_space<vmem>>, vector<1x32x32xf32>
    %37 = vector.shape_cast %36 : vector<1x32x32xf32> to vector<32x32xf32>
    %cst_41 = arith.constant dense<0.000000e+00> : vector<4x32xf32>
    %38 = tpu.matmul %35, %37, %cst_41 {dimension_numbers = #tpu.dot_dimension_numbers<[1], [0], [0], [1], [0, 0, 1, 1], [], []>} : vector<4x32xf32>, vector<32x32xf32>, vector<4x32xf32> -> vector<4x32xf32>
    %39 = arith.addf %32, %38 : vector<4x32xf32>
    %c2_42 = arith.constant 2 : index
    %c0_43 = arith.constant 0 : index
    %c0_44 = arith.constant 0 : index
    %40 = vector.load %arg5[%c2_42, %c0_43, %c0_44] : memref<3x4x8xf32, #tpu.memory_space<vmem>>, vector<1x4x8xf32>
    %41 = vector.shape_cast %40 : vector<1x4x8xf32> to vector<4x8xf32>
    %cst_45 = arith.constant dense<0.000000e+00> : vector<4x32xf32>
    %42 = tpu.matmul %41, %26, %cst_45 {dimension_numbers = #tpu.dot_dimension_numbers<[1], [0], [0], [1], [0, 0, 1, 1], [], []>} : vector<4x8xf32>, vector<8x32xf32>, vector<4x32xf32> -> vector<4x32xf32>
    %c2_46 = arith.constant 2 : index
    %c0_47 = arith.constant 0 : index
    %c0_48 = arith.constant 0 : index
    %43 = vector.load %arg6[%c2_46, %c0_47, %c0_48] : memref<3x32x32xf32, #tpu.memory_space<vmem>>, vector<1x32x32xf32>
    %44 = vector.shape_cast %43 : vector<1x32x32xf32> to vector<32x32xf32>
    %cst_49 = arith.constant dense<0.000000e+00> : vector<4x32xf32>
    %45 = tpu.matmul %42, %44, %cst_49 {dimension_numbers = #tpu.dot_dimension_numbers<[1], [0], [0], [1], [0, 0, 1, 1], [], []>} : vector<4x32xf32>, vector<32x32xf32>, vector<4x32xf32> -> vector<4x32xf32>
    %46 = arith.addf %39, %45 : vector<4x32xf32>
    %c0_50 = arith.constant 0 : index
    %c0_51 = arith.constant 0 : index
    %47 = vector.load %arg7[%c0_50, %c0_51] : memref<1x32xf32, #tpu.memory_space<vmem>>, vector<1x32xf32>
    %48 = vector.broadcast %47 : vector<1x32xf32> to vector<4x32xf32>
    %49 = arith.addf %46, %48 : vector<4x32xf32>
    %cst_52 = arith.constant 0.000000e+00 : f32
    %50 = vector.broadcast %cst_52 : f32 to vector<4x32xf32>
    %51 = arith.maximumf %49, %50 : vector<4x32xf32>
    %c0_53 = arith.constant 0 : index
    %c0_54 = arith.constant 0 : index
    %52 = vector.load %arg8[%c0_53, %c0_54] : memref<32x128xf32, #tpu.memory_space<vmem>>, vector<32x128xf32>
    %cst_55 = arith.constant dense<0.000000e+00> : vector<4x128xf32>
    %53 = tpu.matmul %51, %52, %cst_55 {dimension_numbers = #tpu.dot_dimension_numbers<[1], [0], [0], [1], [0, 0, 1, 1], [], []>} : vector<4x32xf32>, vector<32x128xf32>, vector<4x128xf32> -> vector<4x128xf32>
    %c0_56 = arith.constant 0 : index
    %c0_57 = arith.constant 0 : index
    %54 = vector.load %arg9[%c0_56, %c0_57] : memref<1x128xf32, #tpu.memory_space<vmem>>, vector<1x128xf32>
    %55 = vector.broadcast %54 : vector<1x128xf32> to vector<4x128xf32>
    %56 = arith.addf %53, %55 : vector<4x128xf32>
    %57 = arith.truncf %56 : vector<4x128xf32> to vector<4x128xbf16>
    %c0_58 = arith.constant 0 : index
    %c0_59 = arith.constant 0 : index
    %c0_60 = arith.constant 0 : index
    %58 = vector.load %arg10[%c0_58, %c0_59, %c0_60] : memref<1x4x128xbf16, #tpu.memory_space<vmem>>, vector<1x4x128xbf16>
    %59 = vector.shape_cast %58 : vector<1x4x128xbf16> to vector<4x128xbf16>
    %60 = vector.shape_cast %57 : vector<4x128xbf16> to vector<1x4x128xbf16>
    tpu.vector_store %arg10[%c0_58, %c0_59, %c0_60], %60 {strides = array<i32>} : memref<1x4x128xbf16, #tpu.memory_space<vmem>>, vector<1x4x128xbf16>,
    return
  }
  func.func @transform_0(%arg0: i32) -> (i32, i32, i32) {
    %c0_i32 = arith.constant 0 : i32
    %c0_i32_0 = arith.constant 0 : i32
    %c0_i32_1 = arith.constant 0 : i32
    return %arg0, %c0_i32, %c0_i32_0 : i32, i32, i32
  }
  func.func @transform_1(%arg0: i32) -> (i32, i32, i32) {
    %c0_i32 = arith.constant 0 : i32
    %c0_i32_0 = arith.constant 0 : i32
    %c0_i32_1 = arith.constant 0 : i32
    %c0_i32_2 = arith.constant 0 : i32
    return %c0_i32, %c0_i32_0, %c0_i32_1 : i32, i32, i32
  }
  func.func @transform_2(%arg0: i32) -> (i32, i32, i32) {
    %c0_i32 = arith.constant 0 : i32
    %c0_i32_0 = arith.constant 0 : i32
    %c0_i32_1 = arith.constant 0 : i32
    %c0_i32_2 = arith.constant 0 : i32
    return %c0_i32, %c0_i32_0, %c0_i32_1 : i32, i32, i32
  }
  func.func @transform_3(%arg0: i32) -> (i32, i32) {
    %c0_i32 = arith.constant 0 : i32
    %c0_i32_0 = arith.constant 0 : i32
    %c0_i32_1 = arith.constant 0 : i32
    return %c0_i32, %c0_i32_0 : i32, i32
  }
  func.func @transform_4(%arg0: i32) -> (i32, i32, i32) {
    %c0_i32 = arith.constant 0 : i32
    %c0_i32_0 = arith.constant 0 : i32
    %c0_i32_1 = arith.constant 0 : i32
    %c0_i32_2 = arith.constant 0 : i32
    return %c0_i32, %c0_i32_0, %c0_i32_1 : i32, i32, i32
  }
  func.func @transform_5(%arg0: i32) -> (i32, i32, i32) {
    %c0_i32 = arith.constant 0 : i32
    %c0_i32_0 = arith.constant 0 : i32
    %c0_i32_1 = arith.constant 0 : i32
    %c0_i32_2 = arith.constant 0 : i32
    return %c0_i32, %c0_i32_0, %c0_i32_1 : i32, i32, i32
  }
  func.func @transform_6(%arg0: i32) -> (i32, i32) {
    %c0_i32 = arith.constant 0 : i32
    %c0_i32_0 = arith.constant 0 : i32
    %c0_i32_1 = arith.constant 0 : i32
    return %c0_i32, %c0_i32_0 : i32, i32
  }
  func.func @transform_7(%arg0: i32) -> (i32, i32) {
    %c0_i32 = arith.constant 0 : i32
    %c0_i32_0 = arith.constant 0 : i32
    %c0_i32_1 = arith.constant 0 : i32
    return %c0_i32, %c0_i32_0 : i32, i32
  }
  func.func @transform_8(%arg0: i32) -> (i32, i32) {
    %c0_i32 = arith.constant 0 : i32
    %c0_i32_0 = arith.constant 0 : i32
    %c0_i32_1 = arith.constant 0 : i32
    return %c0_i32, %c0_i32_0 : i32, i32
  }
  func.func @transform_9(%arg0: i32) -> (i32, i32, i32) {
    %c0_i32 = arith.constant 0 : i32
    %c0_i32_0 = arith.constant 0 : i32
    %c0_i32_1 = arith.constant 0 : i32
    return %arg0, %c0_i32, %c0_i32_0 : i32, i32, i32
  }
}

</mosaic_0001>

<llo_original>
// kernel: tpu_custom_call.1
$region0: #{tpu_custom_call.1}
  #allocation0 [shape = 'u32[]', space=smem, size = 0x4, offset = 0x4, fixed_abs, tag = 'smem constant byte address 0x4 - core index']
  #allocation1 [shape = 'u32[72,128]{1,0:T(1,128)}', space=vmem, size = 0x9000, scoped, tag = 'internal scratch']
  %s0 = inlined_call_operand.vmem [shape: f32[2,16,48], index: 0, kind: input, shape index: {}]
  %s1 = inlined_call_operand.vmem [shape: f32[3,8,16], index: 1, kind: input, shape index: {}]
  %s2 = inlined_call_operand.vmem [shape: f32[3,48,32], index: 2, kind: input, shape index: {}]
  %s3 = inlined_call_operand.vmem [shape: f32[1,32], index: 3, kind: input, shape index: {}]
  %s4 = inlined_call_operand.vmem [shape: f32[3,4,8], index: 4, kind: input, shape index: {}]
  %s5 = inlined_call_operand.vmem [shape: f32[3,32,32], index: 5, kind: input, shape index: {}]
  %s6 = inlined_call_operand.vmem [shape: f32[1,32], index: 6, kind: input, shape index: {}]
  %s7 = inlined_call_operand.vmem [shape: f32[32,128], index: 7, kind: input, shape index: {}]
  %s8 = inlined_call_operand.vmem [shape: f32[1,128], index: 8, kind: input, shape index: {}]
  %s9 = inlined_call_operand.hbm [shape: bf16[2,4,128], index: 9, kind: output, shape index: {}]
  %s10 = sld [smem:[#allocation0]]
  $region69: #{tpu_custom_call.1} parent=0
    _
  %s12 = ssub.s32 1, %s10
  %s13 = scalar_select 0, %s12, %s10
  $region1: #{tpu_custom_call.1} parent=0
    #allocation2 [shape = 'u8[2048]{0}', space=vmem, size = 0x800, scoped, tag = 'output window, operand 0']
    #allocation3 [shape = 's32[2]{0}', space=sflag, size = 0x8, scoped, tag = 'scoped memory for tpu_custom_call.1']
    %14 = vsyncpa [#allocation3], 0
    %s15 = scalar_lea.sflag [#allocation3], 1
    %16 = vsyncpa %s15, 0
    loop: start=0, step=1, limit=4
    $region2: #{tpu_custom_call.1} parent=1 // loop_pre_header
      _
    $region3: #{tpu_custom_call.1} parent=1 // loop_header
      %s18 = sphi 0, %s22
      %p19 = scmp.ge.s32.totalorder %s18, 4
      %s28 = sphi 0, %s30
      %s31 = sphi 0, %s28
      %s32 = sphi 0, %s31
      %s48 = sphi 0, %s32
      %s52 = sphi 0, %s52
      %s54 = sphi 0, %s52
      %s55 = sphi 0, %s54
      %s69 = sphi 0, %s55
      %s73 = sphi 0, %s73
      %s75 = sphi 0, %s73
      %s76 = sphi 0, %s75
      %s90 = sphi 0, %s76
      %s94 = sphi 0, %s94
      %s96 = sphi 0, %s94
      %s97 = sphi 0, %s96
      %s111 = sphi 0, %s97
      %s115 = sphi 0, %s115
      %s117 = sphi 0, %s115
      %s118 = sphi 0, %s117
      %s132 = sphi 0, %s118
      %s136 = sphi 0, %s136
      %s138 = sphi 0, %s136
      %s139 = sphi 0, %s138
      %s153 = sphi 0, %s139
      %s157 = sphi 0, %s157
      %s159 = sphi 0, %s157
      %s160 = sphi 0, %s159
      %s174 = sphi 0, %s160
      %s178 = sphi 0, %s178
      %s180 = sphi 0, %s178
      %s181 = sphi 0, %s180
      %s195 = sphi 0, %s181
      %s199 = sphi 0, %s199
      %s201 = sphi 0, %s199
      %s202 = sphi 0, %s201
      %s216 = sphi 0, %s202
      %s222 = sphi 0, %s224
      %s225 = sphi 0, %s222
      %s226 = sphi 0, %s225
      %s242 = sphi 0, %s226
    $region4: #{tpu_custom_call.1} parent=1 // loop_header_branch
      %21 = sbr.rel (%p19) target = $region8
    $region5: #{tpu_custom_call.1} parent=1 // loop_body
      %s23 = ssub.s32 %s18, 1
      %s24 = ssub.s32 %s18, 2
      %s25 = sadd.s32 %s18, 1
      %s26 = ssub.s32 %s18, %s25
      %p27 = scmp.eq.s32.totalorder %s26, 0
      %s29 = sadd.s32 %s28, 1
      %s30 = scalar_select %p27, %s28, %s29
      %p33 = pneg %p27
      %p34 = scmp.eq.s32.totalorder %s18, 1
      %p35 = por %p33, %p34
      %p36 = scmp.ne.s32.totalorder %s28, %s31
      %p37 = scmp.eq.s32.totalorder %s18, 0
      %p38 = por %p36, %p37
      %p39 = scmp.ne.s32.totalorder %s28, %s31
      %p40 = scmp.eq.s32.totalorder %s23, 1
      %p41 = por %p39, %p40
      %p42 = scmp.ne.s32.totalorder %s31, %s32
      %p43 = scmp.eq.s32.totalorder %s23, 0
      %p44 = por %p42, %p43
      %p45 = scmp.ne.s32.totalorder %s31, %s32
      %p46 = scmp.eq.s32.totalorder %s24, 1
      %p47 = por %p45, %p46
      %p49 = scmp.ne.s32.totalorder %s32, %s48
      %p50 = scmp.eq.s32.totalorder %s24, 0
      %p51 = por %p49, %p50
      %s53 = sadd.s32 %s52, 1
      %p56 = scmp.eq.s32.totalorder %s18, 1
      %p57 = scmp.ne.s32.totalorder %s52, %s54
      %p58 = scmp.eq.s32.totalorder %s18, 0
      %p59 = por %p57, %p58
      %p60 = scmp.ne.s32.totalorder %s52, %s54
      %p61 = scmp.eq.s32.totalorder %s23, 1
      %p62 = por %p60, %p61
      %p63 = scmp.ne.s32.totalorder %s54, %s55
      %p64 = scmp.eq.s32.totalorder %s23, 0
      %p65 = por %p63, %p64
      %p66 = scmp.ne.s32.totalorder %s54, %s55
      %p67 = scmp.eq.s32.totalorder %s24, 1
      %p68 = por %p66, %p67
      %p70 = scmp.ne.s32.totalorder %s55, %s69
      %p71 = scmp.eq.s32.totalorder %s24, 0
      %p72 = por %p70, %p71
      %s74 = sadd.s32 %s73, 1
      %p77 = scmp.eq.s32.totalorder %s18, 1
      %p78 = scmp.ne.s32.totalorder %s73, %s75
      %p79 = scmp.eq.s32.totalorder %s18, 0
      %p80 = por %p78, %p79
      %p81 = scmp.ne.s32.totalorder %s73, %s75
      %p82 = scmp.eq.s32.totalorder %s23, 1
      %p83 = por %p81, %p82
      %p84 = scmp.ne.s32.totalorder %s75, %s76
      %p85 = scmp.eq.s32.totalorder %s23, 0
      %p86 = por %p84, %p85
      %p87 = scmp.ne.s32.totalorder %s75, %s76
      %p88 = scmp.eq.s32.totalorder %s24, 1
      %p89 = por %p87, %p88
      %p91 = scmp.ne.s32.totalorder %s76, %s90
      %p92 = scmp.eq.s32.totalorder %s24, 0
      %p93 = por %p91, %p92
      %s95 = sadd.s32 %s94, 1
      %p98 = scmp.eq.s32.totalorder %s18, 1
      %p99 = scmp.ne.s32.totalorder %s94, %s96
      %p100 = scmp.eq.s32.totalorder %s18, 0
      %p101 = por %p99, %p100
      %p102 = scmp.ne.s32.totalorder %s94, %s96
      %p103 = scmp.eq.s32.totalorder %s23, 1
      %p104 = por %p102, %p103
      %p105 = scmp.ne.s32.totalorder %s96, %s97
      %p106 = scmp.eq.s32.totalorder %s23, 0
      %p107 = por %p105, %p106
      %p108 = scmp.ne.s32.totalorder %s96, %s97
      %p109 = scmp.eq.s32.totalorder %s24, 1
      %p110 = por %p108, %p109
      %p112 = scmp.ne.s32.totalorder %s97, %s111
      %p113 = scmp.eq.s32.totalorder %s24, 0
      %p114 = por %p112, %p113
      %s116 = sadd.s32 %s115, 1
      %p119 = scmp.eq.s32.totalorder %s18, 1
      %p120 = scmp.ne.s32.totalorder %s115, %s117
      %p121 = scmp.eq.s32.totalorder %s18, 0
      %p122 = por %p120, %p121
      %p123 = scmp.ne.s32.totalorder %s115, %s117
      %p124 = scmp.eq.s32.totalorder %s23, 1
      %p125 = por %p123, %p124
      %p126 = scmp.ne.s32.totalorder %s117, %s118
      %p127 = scmp.eq.s32.totalorder %s23, 0
      %p128 = por %p126, %p127
      %p129 = scmp.ne.s32.totalorder %s117, %s118
      %p130 = scmp.eq.s32.totalorder %s24, 1
      %p131 = por %p129, %p130
      %p133 = scmp.ne.s32.totalorder %s118, %s132
      %p134 = scmp.eq.s32.totalorder %s24, 0
      %p135 = por %p133, %p134
      %s137 = sadd.s32 %s136, 1
      %p140 = scmp.eq.s32.totalorder %s18, 1
      %p141 = scmp.ne.s32.totalorder %s136, %s138
      %p142 = scmp.eq.s32.totalorder %s18, 0
      %p143 = por %p141, %p142
      %p144 = scmp.ne.s32.totalorder %s136, %s138
      %p145 = scmp.eq.s32.totalorder %s23, 1
      %p146 = por %p144, %p145
      %p147 = scmp.ne.s32.totalorder %s138, %s139
      %p148 = scmp.eq.s32.totalorder %s23, 0
      %p149 = por %p147, %p148
      %p150 = scmp.ne.s32.totalorder %s138, %s139
      %p151 = scmp.eq.s32.totalorder %s24, 1
      %p152 = por %p150, %p151
      %p154 = scmp.ne.s32.totalorder %s139, %s153
      %p155 = scmp.eq.s32.totalorder %s24, 0
      %p156 = por %p154, %p155
      %s158 = sadd.s32 %s157, 1
      %p161 = scmp.eq.s32.totalorder %s18, 1
      %p162 = scmp.ne.s32.totalorder %s157, %s159
      %p163 = scmp.eq.s32.totalorder %s18, 0
      %p164 = por %p162, %p163
      %p165 = scmp.ne.s32.totalorder %s157, %s159
      %p166 = scmp.eq.s32.totalorder %s23, 1
      %p167 = por %p165, %p166
      %p168 = scmp.ne.s32.totalorder %s159, %s160
      %p169 = scmp.eq.s32.totalorder %s23, 0
      %p170 = por %p168, %p169
      %p171 = scmp.ne.s32.totalorder %s159, %s160
      %p172 = scmp.eq.s32.totalorder %s24, 1
      %p173 = por %p171, %p172
      %p175 = scmp.ne.s32.totalorder %s160, %s174
      %p176 = scmp.eq.s32.totalorder %s24, 0
      %p177 = por %p175, %p176
      %s179 = sadd.s32 %s178, 1
      %p182 = scmp.eq.s32.totalorder %s18, 1
      %p183 = scmp.ne.s32.totalorder %s178, %s180
      %p184 = scmp.eq.s32.totalorder %s18, 0
      %p185 = por %p183, %p184
      %p186 = scmp.ne.s32.totalorder %s178, %s180
      %p187 = scmp.eq.s32.totalorder %s23, 1
      %p188 = por %p186, %p187
      %p189 = scmp.ne.s32.totalorder %s180, %s181
      %p190 = scmp.eq.s32.totalorder %s23, 0
      %p191 = por %p189, %p190
      %p192 = scmp.ne.s32.totalorder %s180, %s181
      %p193 = scmp.eq.s32.totalorder %s24, 1
      %p194 = por %p192, %p193
      %p196 = scmp.ne.s32.totalorder %s181, %s195
      %p197 = scmp.eq.s32.totalorder %s24, 0
      %p198 = por %p196, %p197
      %s200 = sadd.s32 %s199, 1
      %p203 = scmp.eq.s32.totalorder %s18, 1
      %p204 = scmp.ne.s32.totalorder %s199, %s201
      %p205 = scmp.eq.s32.totalorder %s18, 0
      %p206 = por %p204, %p205
      %p207 = scmp.ne.s32.totalorder %s199, %s201
      %p208 = scmp.eq.s32.totalorder %s23, 1
      %p209 = por %p207, %p208
      %p210 = scmp.ne.s32.totalorder %s201, %s202
      %p211 = scmp.eq.s32.totalorder %s23, 0
      %p212 = por %p210, %p211
      %p213 = scmp.ne.s32.totalorder %s201, %s202
      %p214 = scmp.eq.s32.totalorder %s24, 1
      %p215 = por %p213, %p214
      %p217 = scmp.ne.s32.totalorder %s202, %s216
      %p218 = scmp.eq.s32.totalorder %s24, 0
      %p219 = por %p217, %p218
      %s220 = ssub.s32 %s18, %s25
      %p221 = scmp.eq.s32.totalorder %s220, 0
      %s223 = sadd.s32 %s222, 1
      %s224 = scalar_select %p221, %s222, %s223
      %p227 = pneg %p221
      %p228 = scmp.eq.s32.totalorder %s18, 1
      %p229 = por %p227, %p228
      %p230 = scmp.ne.s32.totalorder %s222, %s225
      %p231 = scmp.eq.s32.totalorder %s18, 0
      %p232 = por %p230, %p231
      %p233 = scmp.ne.s32.totalorder %s222, %s225
      %p234 = scmp.eq.s32.totalorder %s23, 1
      %p235 = por %p233, %p234
      %p236 = scmp.ne.s32.totalorder %s225, %s226
      %p237 = scmp.eq.s32.totalorder %s23, 0
      %p238 = por %p236, %p237
      %p239 = scmp.ne.s32.totalorder %s225, %s226
      %p240 = scmp.eq.s32.totalorder %s24, 1
      %p241 = por %p239, %p240
      %p243 = scmp.ne.s32.totalorder %s226, %s242
      %p244 = scmp.eq.s32.totalorder %s24, 0
      %p245 = por %p243, %p244
      %p246 = scmp.le.s32.totalorder 1, %s18
      %p247 = scmp.lt.s32.totalorder %s18, 3
      %p248 = pnand %p246, %p247
      %p249 = pneg %p248
      // Predicated region
      $region9: #{tpu_custom_call.1} parent=5 // pred_check
        _
      $region10: #{tpu_custom_call.1} parent=5 // pred_check_branch
        %251 = sbr.rel (%p248) target = $region12
      $region11: #{tpu_custom_call.1} parent=5 // pred_region
        %s252 = ssub.s32 %s18, 1
        // Predicated region
        $region13: #{tpu_custom_call.1} parent=11 // pred_check
          %p253 = pneg %p65
        $region14: #{tpu_custom_call.1} parent=11 // pred_check_branch
          %255 = sbr.rel (%p253) target = $region16
        $region15: #{tpu_custom_call.1} parent=11 // pred_region
          _
        $region16: #{tpu_custom_call.1} parent=11 // pred_fallthru
          _
        // Predicated region
        $region17: #{tpu_custom_call.1} parent=11 // pred_check
          %p256 = pneg %p86
        $region18: #{tpu_custom_call.1} parent=11 // pred_check_branch
          %258 = sbr.rel (%p256) target = $region20
        $region19: #{tpu_custom_call.1} parent=11 // pred_region
          _
        $region20: #{tpu_custom_call.1} parent=11 // pred_fallthru
          _
        // Predicated region
        $region21: #{tpu_custom_call.1} parent=11 // pred_check
          %p259 = pneg %p107
        $region22: #{tpu_custom_call.1} parent=11 // pred_check_branch
          %261 = sbr.rel (%p259) target = $region24
        $region23: #{tpu_custom_call.1} parent=11 // pred_region
          _
        $region24: #{tpu_custom_call.1} parent=11 // pred_fallthru
          _
        // Predicated region
        $region25: #{tpu_custom_call.1} parent=11 // pred_check
          %p262 = pneg %p128
        $region26: #{tpu_custom_call.1} parent=11 // pred_check_branch
          %264 = sbr.rel (%p262) target = $region28
        $region27: #{tpu_custom_call.1} parent=11 // pred_region
          _
        $region28: #{tpu_custom_call.1} parent=11 // pred_fallthru
          _
        // Predicated region
        $region29: #{tpu_custom_call.1} parent=11 // pred_check
          %p265 = pneg %p149
        $region30: #{tpu_custom_call.1} parent=11 // pred_check_branch
          %267 = sbr.rel (%p265) target = $region32
        $region31: #{tpu_custom_call.1} parent=11 // pred_region
          _
        $region32: #{tpu_custom_call.1} parent=11 // pred_fallthru
          _
        // Predicated region
        $region33: #{tpu_custom_call.1} parent=11 // pred_check
          %p268 = pneg %p170
        $region34: #{tpu_custom_call.1} parent=11 // pred_check_branch
          %270 = sbr.rel (%p268) target = $region36
        $region35: #{tpu_custom_call.1} parent=11 // pred_region
          _
        $region36: #{tpu_custom_call.1} parent=11 // pred_fallthru
          _
        // Predicated region
        $region37: #{tpu_custom_call.1} parent=11 // pred_check
          %p271 = pneg %p191
        $region38: #{tpu_custom_call.1} parent=11 // pred_check_branch
          %273 = sbr.rel (%p271) target = $region40
        $region39: #{tpu_custom_call.1} parent=11 // pred_region
          _
        $region40: #{tpu_custom_call.1} parent=11 // pred_fallthru
          _
        // Predicated region
        $region41: #{tpu_custom_call.1} parent=11 // pred_check
          %p274 = pneg %p212
        $region42: #{tpu_custom_call.1} parent=11 // pred_check_branch
          %276 = sbr.rel (%p274) target = $region44
        $region43: #{tpu_custom_call.1} parent=11 // pred_region
          _
        $region44: #{tpu_custom_call.1} parent=11 // pred_fallthru
          _
      $region12: #{tpu_custom_call.1} parent=5 // pred_fallthru
        _
      %p277 = scmp.lt.s32.totalorder %s18, 2
      // Predicated region
      $region45: #{tpu_custom_call.1} parent=5 // pred_check
        %p278 = pneg %p277
      $region46: #{tpu_custom_call.1} parent=5 // pred_check_branch
        %280 = sbr.rel (%p278) target = $region48
      $region47: #{tpu_custom_call.1} parent=5 // pred_region
        // Predicated region
        $region49: #{tpu_custom_call.1} parent=47 // pred_check
          %p281 = pneg %p38
        $region50: #{tpu_custom_call.1} parent=47 // pred_check_branch
          %283 = sbr.rel (%p281) target = $region52
        $region51: #{tpu_custom_call.1} parent=47 // pred_region
          %p284 = scmp.lt.s32.totalorder %s18, 1
          %s285 = scalar_select %p284, %s18, 1
          %s286 = smul.addr %s285, 2
          %s287 = smul.addr %s286, 8
          %s288 = scalar_lea.vmem %s0, %s287
        $region52: #{tpu_custom_call.1} parent=47 // pred_fallthru
          _
      $region48: #{tpu_custom_call.1} parent=5 // pred_fallthru
        _
      %p289 = scmp.le.s32.totalorder 1, %s18
      %p290 = scmp.lt.s32.totalorder %s18, 3
      %p291 = pnand %p289, %p290
      %p292 = pneg %p291
      // Predicated region
      $region53: #{tpu_custom_call.1} parent=5 // pred_check
        _
      $region54: #{tpu_custom_call.1} parent=5 // pred_check_branch
        %294 = sbr.rel (%p291) target = $region56
      $region55: #{tpu_custom_call.1} parent=5 // pred_region
        %s295 = ssub.s32 %s18, 1
        %p296 = scmp.lt.s32.totalorder %s23, 1
        %s297 = scalar_select %p296, %s23, 1
        %s298 = smul.addr %s297, 2
        %s299 = smul.addr %s298, 8
        %s300 = scalar_lea.vmem %s0, %s299
        %p301 = pneg %p44
        %p302 = pneg %p41
        %p303 = pneg %p65
        %p304 = pneg %p62
        %p305 = pneg %p86
        %p306 = pneg %p83
        %p307 = pneg %p107
        %p308 = pneg %p104
        %p309 = pneg %p128
        %p310 = pneg %p125
        %p311 = pneg %p149
        %p312 = pneg %p146
        %p313 = pneg %p170
        %p314 = pneg %p167
        %p315 = pneg %p191
        %p316 = pneg %p188
        %p317 = pneg %p212
        %p318 = pneg %p209
        %p319 = pneg %p238
        %p320 = pneg %p235
        %s321 = sand.u32 %s225, 1
        %s322 = scalar_lea.sflag [#allocation3], %s321
        %s323 = sand.u32 %s225, 1
        %s324 = smul.addr %s323, 2
        %s325 = scalar_lea.vmem [#allocation2], %s324
        %p326 = scmp.lt.s32.totalorder %s23, 1
        %s327 = scalar_select %p326, %s23, 1
        %s328 = smul.addr %s327, 2
        %s329 = smul.addr %s328, 8
        %s330 = scalar_lea.vmem %s0, %s329
        %v331 = vld [vmem:[%s330] sm:$0xff]
        %v332 = vld [vmem:[%s330 + $0x8] sm:$0xff]
        %v333 = vld [vmem:[%s1] sm:$0xff]
        %vm334 = vcmask 130048
        %v336 = vsel %vm334, %v333, 0
        %338 = vmatpush.msra.mxu0 0.0
        %339 = vmatpush.msra.mxu0 0.0
        %340 = vmatpush.msra.mxu0 0.0
        %341 = vmatpush.msra.mxu0 0.0
        %342 = vmatpush.msra.mxu0 0.0
        %343 = vmatpush.msra.mxu0 0.0
        %344 = vmatpush.msra.mxu0 0.0
        %345 = vmatpush.msra.mxu0 0.0
        %346 = vmatpush.msra.mxu0 0.0
        %347 = vmatpush.msra.mxu0 0.0
        %348 = vmatpush.msra.mxu0 0.0
        %349 = vmatpush.msra.mxu0 0.0
        %350 = vmatpush.msra.mxu0 0.0
        %351 = vmatpush.msra.mxu0 0.0
        %352 = vmatpush.msra.mxu0 %v332
        %353 = vmatpush.msra.mxu0 %v331
        %354 = vmatmul.f32.gmra.mxu0 %v336
        %v355 = vpop.f32.mrf.mxu0
        %v356 = vadd.f32 0.0, %v355
        %357 = vdwg.mxu0
        %v358 = vld [vmem:[%s2] sm:$0xff]
        %v359 = vld [vmem:[%s2 + $0x8] sm:$0xff]
        %v360 = vld [vmem:[%s2 + $0x10] sm:$0xff]
        %v361 = vld [vmem:[%s2 + $0x18] sm:$0xff]
        %v362 = vld [vmem:[%s2 + $0x20] sm:$0xff]
        %v363 = vld [vmem:[%s2 + $0x28] sm:$0xff]
        %s364 = scalar_lea.vmem %s1, 8
        %v365 = vld [vmem:[%s364] sm:$0xff]
        %v367 = vsel %vm334, %v365, 0
        %369 = vmatpush.msra.mxu0 0.0
        %370 = vmatpush.msra.mxu0 0.0
        %371 = vmatpush.msra.mxu0 0.0
        %372 = vmatpush.msra.mxu0 0.0
        %373 = vmatpush.msra.mxu0 0.0
        %374 = vmatpush.msra.mxu0 0.0
        %375 = vmatpush.msra.mxu0 0.0
        %376 = vmatpush.msra.mxu0 0.0
        %377 = vmatpush.msra.mxu0 0.0
        %378 = vmatpush.msra.mxu0 0.0
        %379 = vmatpush.msra.mxu0 0.0
        %380 = vmatpush.msra.mxu0 0.0
        %381 = vmatpush.msra.mxu0 0.0
        %382 = vmatpush.msra.mxu0 0.0
        %383 = vmatpush.msra.mxu0 %v332
        %384 = vmatpush.msra.mxu0 %v331
        %385 = vmatmul.f32.gmra.mxu0 %v367
        %v386 = vpop.f32.mrf.mxu0
        %v387 = vadd.f32 0.0, %v386
        %388 = vdwg.mxu0
        %s389 = scalar_lea.vmem %s2, 48
        %v390 = vld [vmem:[%s389] sm:$0xff]
        %v391 = vld [vmem:[%s389 + $0x8] sm:$0xff]
        %v392 = vld [vmem:[%s389 + $0x10] sm:$0xff]
        %v393 = vld [vmem:[%s389 + $0x18] sm:$0xff]
        %v394 = vld [vmem:[%s389 + $0x20] sm:$0xff]
        %v395 = vld [vmem:[%s389 + $0x28] sm:$0xff]
        %vm396 = vcmask 392192
        %v398 = vsel %vm396, %v387, 0
        %400 = vmatpush.msra.mxu0 0.0
        %401 = vmatpush.msra.mxu0 0.0
        %402 = vmatpush.msra.mxu0 0.0
        %403 = vmatpush.msra.mxu0 0.0
        %404 = vmatpush.msra.mxu0 0.0
        %405 = vmatpush.msra.mxu0 0.0
        %406 = vmatpush.msra.mxu0 0.0
        %407 = vmatpush.msra.mxu0 0.0
        %408 = vmatpush.msra.mxu0 0.0
        %409 = vmatpush.msra.mxu0 0.0
        %410 = vmatpush.msra.mxu0 %v395
        %411 = vmatpush.msra.mxu0 %v394
        %412 = vmatpush.msra.mxu0 %v393
        %413 = vmatpush.msra.mxu0 %v392
        %414 = vmatpush.msra.mxu0 %v391
        %415 = vmatpush.msra.mxu0 %v390
        %416 = vmatmul.f32.gmra.mxu0 %v398
        %v417 = vpop.f32.mrf.mxu0
        %v418 = vadd.f32 0.0, %v417
        %419 = vdwg.mxu0
        %v421 = vsel %vm396, %v356, 0
        %423 = vmatpush.msra.mxu0 0.0
        %424 = vmatpush.msra.mxu0 0.0
        %425 = vmatpush.msra.mxu0 0.0
        %426 = vmatpush.msra.mxu0 0.0
        %427 = vmatpush.msra.mxu0 0.0
        %428 = vmatpush.msra.mxu0 0.0
        %429 = vmatpush.msra.mxu0 0.0
        %430 = vmatpush.msra.mxu0 0.0
        %431 = vmatpush.msra.mxu0 0.0
        %432 = vmatpush.msra.mxu0 0.0
        %433 = vmatpush.msra.mxu0 %v363
        %434 = vmatpush.msra.mxu0 %v362
        %435 = vmatpush.msra.mxu0 %v361
        %436 = vmatpush.msra.mxu0 %v360
        %437 = vmatpush.msra.mxu0 %v359
        %438 = vmatpush.msra.mxu0 %v358
        %439 = vmatmul.f32.gmra.mxu0 %v421
        %v440 = vpop.f32.mrf.mxu0
        %v441 = vadd.f32 %v418, %v440
        %442 = vdwg.mxu0
        %s443 = scalar_lea.vmem %s1, 16
        %v444 = vld [vmem:[%s443] sm:$0xff]
        %v446 = vsel %vm334, %v444, 0
        %448 = vmatpush.msra.mxu0 0.0
        %449 = vmatpush.msra.mxu0 0.0
        %450 = vmatpush.msra.mxu0 0.0
        %451 = vmatpush.msra.mxu0 0.0
        %452 = vmatpush.msra.mxu0 0.0
        %453 = vmatpush.msra.mxu0 0.0
        %454 = vmatpush.msra.mxu0 0.0
        %455 = vmatpush.msra.mxu0 0.0
        %456 = vmatpush.msra.mxu0 0.0
        %457 = vmatpush.msra.mxu0 0.0
        %458 = vmatpush.msra.mxu0 0.0
        %459 = vmatpush.msra.mxu0 0.0
        %460 = vmatpush.msra.mxu0 0.0
        %461 = vmatpush.msra.mxu0 0.0
        %462 = vmatpush.msra.mxu0 %v332
        %463 = vmatpush.msra.mxu0 %v331
        %464 = vmatmul.f32.gmra.mxu0 %v446
        %v465 = vpop.f32.mrf.mxu0
        %v466 = vadd.f32 0.0, %v465
        %467 = vdwg.mxu0
        %s468 = scalar_lea.vmem %s2, 96
        %v469 = vld [vmem:[%s468] sm:$0xff]
        %v470 = vld [vmem:[%s468 + $0x8] sm:$0xff]
        %v471 = vld [vmem:[%s468 + $0x10] sm:$0xff]
        %v472 = vld [vmem:[%s468 + $0x18] sm:$0xff]
        %v473 = vld [vmem:[%s468 + $0x20] sm:$0xff]
        %v474 = vld [vmem:[%s468 + $0x28] sm:$0xff]
        %v476 = vsel %vm396, %v466, 0
        %478 = vmatpush.msra.mxu0 0.0
        %479 = vmatpush.msra.mxu0 0.0
        %480 = vmatpush.msra.mxu0 0.0
        %481 = vmatpush.msra.mxu0 0.0
        %482 = vmatpush.msra.mxu0 0.0
        %483 = vmatpush.msra.mxu0 0.0
        %484 = vmatpush.msra.mxu0 0.0
        %485 = vmatpush.msra.mxu0 0.0
        %486 = vmatpush.msra.mxu0 0.0
        %487 = vmatpush.msra.mxu0 0.0
        %488 = vmatpush.msra.mxu0 %v474
        %489 = vmatpush.msra.mxu0 %v473
        %490 = vmatpush.msra.mxu0 %v472
        %491 = vmatpush.msra.mxu0 %v471
        %492 = vmatpush.msra.mxu0 %v470
        %493 = vmatpush.msra.mxu0 %v469
        %494 = vmatmul.f32.gmra.mxu0 %v476
        %v495 = vpop.f32.mrf.mxu0
        %v496 = vadd.f32 0.0, %v495
        %497 = vdwg.mxu0
        %v498 = vadd.f32 %v441, %v496
        %v499 = vld [vmem:[%s3] sm:$0x1]
        %v501 = vperm.slane %v499, 0
        %v503 = vadd.f32 %v498, %v501
        %v504 = vmax.f32 %v503, 0.0
        %v505 = vld [vmem:[%s4] sm:$0xf]
        %vm506 = vcmask 64512
        %v508 = vsel %vm506, %v505, 0
        %510 = vmatpush.msra.mxu0 0.0
        %511 = vmatpush.msra.mxu0 0.0
        %512 = vmatpush.msra.mxu0 0.0
        %513 = vmatpush.msra.mxu0 0.0
        %514 = vmatpush.msra.mxu0 0.0
        %515 = vmatpush.msra.mxu0 0.0
        %516 = vmatpush.msra.mxu0 0.0
        %517 = vmatpush.msra.mxu0 0.0
        %518 = vmatpush.msra.mxu0 0.0
        %519 = vmatpush.msra.mxu0 0.0
        %520 = vmatpush.msra.mxu0 0.0
        %521 = vmatpush.msra.mxu0 0.0
        %522 = vmatpush.msra.mxu0 0.0
        %523 = vmatpush.msra.mxu0 0.0
        %524 = vmatpush.msra.mxu0 0.0
        %525 = vmatpush.msra.mxu0 %v504
        %526 = vmatmul.f32.gmra.mxu0 %v508
        %v527 = vpop.f32.mrf.mxu0
        %v528 = vadd.f32 0.0, %v527
        %529 = vdwg.mxu0
        %v530 = vld [vmem:[%s5] sm:$0xff]
        %v531 = vld [vmem:[%s5 + $0x8] sm:$0xff]
        %v532 = vld [vmem:[%s5 + $0x10] sm:$0xff]
        %v533 = vld [vmem:[%s5 + $0x18] sm:$0xff]
        %s534 = scalar_lea.vmem %s4, 4
        %v535 = vld [vmem:[%s534] sm:$0xf]
        %v537 = vsel %vm506, %v535, 0
        %539 = vmatpush.msra.mxu0 0.0
        %540 = vmatpush.msra.mxu0 0.0
        %541 = vmatpush.msra.mxu0 0.0
        %542 = vmatpush.msra.mxu0 0.0
        %543 = vmatpush.msra.mxu0 0.0
        %544 = vmatpush.msra.mxu0 0.0
        %545 = vmatpush.msra.mxu0 0.0
        %546 = vmatpush.msra.mxu0 0.0
        %547 = vmatpush.msra.mxu0 0.0
        %548 = vmatpush.msra.mxu0 0.0
        %549 = vmatpush.msra.mxu0 0.0
        %550 = vmatpush.msra.mxu0 0.0
        %551 = vmatpush.msra.mxu0 0.0
        %552 = vmatpush.msra.mxu0 0.0
        %553 = vmatpush.msra.mxu0 0.0
        %554 = vmatpush.msra.mxu0 %v504
        %555 = vmatmul.f32.gmra.mxu0 %v537
        %v556 = vpop.f32.mrf.mxu0
        %v557 = vadd.f32 0.0, %v556
        %558 = vdwg.mxu0
        %s559 = scalar_lea.vmem %s5, 32
        %v560 = vld [vmem:[%s559] sm:$0xff]
        %v561 = vld [vmem:[%s559 + $0x8] sm:$0xff]
        %v562 = vld [vmem:[%s559 + $0x10] sm:$0xff]
        %v563 = vld [vmem:[%s559 + $0x18] sm:$0xff]
        %vm564 = vcmask 261120
        %v566 = vsel %vm564, %v557, 0
        %568 = vmatpush.msra.mxu0 0.0
        %569 = vmatpush.msra.mxu0 0.0
        %570 = vmatpush.msra.mxu0 0.0
        %571 = vmatpush.msra.mxu0 0.0
        %572 = vmatpush.msra.mxu0 0.0
        %573 = vmatpush.msra.mxu0 0.0
        %574 = vmatpush.msra.mxu0 0.0
        %575 = vmatpush.msra.mxu0 0.0
        %576 = vmatpush.msra.mxu0 0.0
        %577 = vmatpush.msra.mxu0 0.0
        %578 = vmatpush.msra.mxu0 0.0
        %579 = vmatpush.msra.mxu0 0.0
        %580 = vmatpush.msra.mxu0 %v563
        %581 = vmatpush.msra.mxu0 %v562
        %582 = vmatpush.msra.mxu0 %v561
        %583 = vmatpush.msra.mxu0 %v560
        %584 = vmatmul.f32.gmra.mxu0 %v566
        %v585 = vpop.f32.mrf.mxu0
        %v586 = vadd.f32 0.0, %v585
        %587 = vdwg.mxu0
        %v589 = vsel %vm564, %v528, 0
        %591 = vmatpush.msra.mxu0 0.0
        %592 = vmatpush.msra.mxu0 0.0
        %593 = vmatpush.msra.mxu0 0.0
        %594 = vmatpush.msra.mxu0 0.0
        %595 = vmatpush.msra.mxu0 0.0
        %596 = vmatpush.msra.mxu0 0.0
        %597 = vmatpush.msra.mxu0 0.0
        %598 = vmatpush.msra.mxu0 0.0
        %599 = vmatpush.msra.mxu0 0.0
        %600 = vmatpush.msra.mxu0 0.0
        %601 = vmatpush.msra.mxu0 0.0
        %602 = vmatpush.msra.mxu0 0.0
        %603 = vmatpush.msra.mxu0 %v533
        %604 = vmatpush.msra.mxu0 %v532
        %605 = vmatpush.msra.mxu0 %v531
        %606 = vmatpush.msra.mxu0 %v530
        %607 = vmatmul.f32.gmra.mxu0 %v589
        %v608 = vpop.f32.mrf.mxu0
        %v609 = vadd.f32 %v586, %v608
        %610 = vdwg.mxu0
        %s611 = scalar_lea.vmem %s4, 8
        %v612 = vld [vmem:[%s611] sm:$0xf]
        %v614 = vsel %vm506, %v612, 0
        %616 = vmatpush.msra.mxu0 0.0
        %617 = vmatpush.msra.mxu0 0.0
        %618 = vmatpush.msra.mxu0 0.0
        %619 = vmatpush.msra.mxu0 0.0
        %620 = vmatpush.msra.mxu0 0.0
        %621 = vmatpush.msra.mxu0 0.0
        %622 = vmatpush.msra.mxu0 0.0
        %623 = vmatpush.msra.mxu0 0.0
        %624 = vmatpush.msra.mxu0 0.0
        %625 = vmatpush.msra.mxu0 0.0
        %626 = vmatpush.msra.mxu0 0.0
        %627 = vmatpush.msra.mxu0 0.0
        %628 = vmatpush.msra.mxu0 0.0
        %629 = vmatpush.msra.mxu0 0.0
        %630 = vmatpush.msra.mxu0 0.0
        %631 = vmatpush.msra.mxu0 %v504
        %632 = vmatmul.f32.gmra.mxu0 %v614
        %v633 = vpop.f32.mrf.mxu0
        %v634 = vadd.f32 0.0, %v633
        %635 = vdwg.mxu0
        %s636 = scalar_lea.vmem %s5, 64
        %v637 = vld [vmem:[%s636] sm:$0xff]
        %v638 = vld [vmem:[%s636 + $0x8] sm:$0xff]
        %v639 = vld [vmem:[%s636 + $0x10] sm:$0xff]
        %v640 = vld [vmem:[%s636 + $0x18] sm:$0xff]
        %v642 = vsel %vm564, %v634, 0
        %644 = vmatpush.msra.mxu0 0.0
        %645 = vmatpush.msra.mxu0 0.0
        %646 = vmatpush.msra.mxu0 0.0
        %647 = vmatpush.msra.mxu0 0.0
        %648 = vmatpush.msra.mxu0 0.0
        %649 = vmatpush.msra.mxu0 0.0
        %650 = vmatpush.msra.mxu0 0.0
        %651 = vmatpush.msra.mxu0 0.0
        %652 = vmatpush.msra.mxu0 0.0
        %653 = vmatpush.msra.mxu0 0.0
        %654 = vmatpush.msra.mxu0 0.0
        %655 = vmatpush.msra.mxu0 0.0
        %656 = vmatpush.msra.mxu0 %v640
        %657 = vmatpush.msra.mxu0 %v639
        %658 = vmatpush.msra.mxu0 %v638
        %659 = vmatpush.msra.mxu0 %v637
        %660 = vmatmul.f32.gmra.mxu0 %v642
        %v661 = vpop.f32.mrf.mxu0
        %v662 = vadd.f32 0.0, %v661
        %663 = vdwg.mxu0
        %v664 = vadd.f32 %v609, %v662
        %v665 = vld [vmem:[%s6] sm:$0x1]
        %v667 = vperm.slane %v665, 0
        %v669 = vadd.f32 %v664, %v667
        %v670 = vmax.f32 %v669, 0.0
        %v671 = vld [vmem:[%s7] sm:$0xff]
        %v672 = vld [vmem:[%s7 + $0x8] sm:$0xff]
        %v673 = vld [vmem:[%s7 + $0x10] sm:$0xff]
        %v674 = vld [vmem:[%s7 + $0x18] sm:$0xff]
        %v675 = vld [vmem:[%s8] sm:$0x1]
        %v677 = vperm.slane %v675, 0
        %v680 = vsel %vm564, %v670, 0
        %682 = vmatpush.msra.mxu0 0.0
        %683 = vmatpush.msra.mxu0 0.0
        %684 = vmatpush.msra.mxu0 0.0
        %685 = vmatpush.msra.mxu0 0.0
        %686 = vmatpush.msra.mxu0 0.0
        %687 = vmatpush.msra.mxu0 0.0
        %688 = vmatpush.msra.mxu0 0.0
        %689 = vmatpush.msra.mxu0 0.0
        %690 = vmatpush.msra.mxu0 0.0
        %691 = vmatpush.msra.mxu0 0.0
        %692 = vmatpush.msra.mxu0 0.0
        %693 = vmatpush.msra.mxu0 0.0
        %694 = vmatpush.msra.mxu0 %v674
        %695 = vmatpush.msra.mxu0 %v673
        %696 = vmatpush.msra.mxu0 %v672
        %697 = vmatpush.msra.mxu0 %v671
        %698 = vmatmul.f32.gmra.mxu0 %v680
        %v699 = vpop.f32.mrf.mxu0
        %v700 = vadd.f32 %v677, %v699
        %701 = vdwg.mxu0
        %v702 = vpack.c.bf16 %v700, %v700
        %703 = vst [vmem:[%s325] sm:$0x3] %v702
        %s704 = sand.u32 %s225, 1
        %s705 = scalar_lea.sflag [#allocation3], %s704
        %s706 = sand.u32 %s225, 1
        %s707 = smul.addr %s706, 2
        %s708 = scalar_lea.vmem [#allocation2], %s707
        // Predicated region
        $region57: #{tpu_custom_call.1} parent=55 // pred_check
          %p709 = pneg %p235
        $region58: #{tpu_custom_call.1} parent=55 // pred_check_branch
          %711 = sbr.rel (%p709) target = $region60
        $region59: #{tpu_custom_call.1} parent=55 // pred_region
          %713 = vsyncadd %s705, 0
          %s714 = smul.addr %s23, 2
          %s715 = scalar_lea.hbm %s9, %s714
          %s717 = sshll.u32 %s708, 4
          %s718 = int_to_ptr.vmem [resolvable:$true] %s717
          %s719 = sshll.u32 %s715, 4
          %s720 = int_to_ptr.hbm [resolvable:$true] %s719
          %722 = dma.vmem_to_hbm [thread:$0]  %s718, 32, %s720, %s705
        $region60: #{tpu_custom_call.1} parent=55 // pred_fallthru
          _
      $region56: #{tpu_custom_call.1} parent=5 // pred_fallthru
        _
      %p723 = scmp.le.s32.totalorder 2, %s18
      // Predicated region
      $region61: #{tpu_custom_call.1} parent=5 // pred_check
        %p724 = pneg %p723
      $region62: #{tpu_custom_call.1} parent=5 // pred_check_branch
        %726 = sbr.rel (%p724) target = $region64
      $region63: #{tpu_custom_call.1} parent=5 // pred_region
        %s727 = ssub.s32 %s18, 2
        // Predicated region
        $region65: #{tpu_custom_call.1} parent=63 // pred_check
          %p728 = pneg %p241
        $region66: #{tpu_custom_call.1} parent=63 // pred_check_branch
          %730 = sbr.rel (%p728) target = $region68
        $region67: #{tpu_custom_call.1} parent=63 // pred_region
          %s731 = sand.u32 %s226, 1
          %s732 = scalar_lea.sflag [#allocation3], %s731
          %s733 = sand.u32 %s226, 1
          %s734 = smul.addr %s733, 2
          %s735 = scalar_lea.vmem [#allocation2], %s734
          %737 = dma.done %s732, 32
        $region68: #{tpu_custom_call.1} parent=63 // pred_fallthru
          _
      $region64: #{tpu_custom_call.1} parent=5 // pred_fallthru
        _
    $region6: #{tpu_custom_call.1} parent=1 // loop_footer
      %s22 = sadd.s32 1, %s18
    $region7: #{tpu_custom_call.1} parent=1 // loop_footer_branch
      %17 = sbr.rel target = $region3
    $region8: #{tpu_custom_call.1} parent=1 // loop_exit
      _
    %738 = vsyncpa [#allocation3], 1
    %s739 = scalar_lea.sflag [#allocation3], 1
    %740 = vsyncpa %s739, 1

</llo_original>
